<compile_context>
chip_gen: v7x
topology: tpu7x:2x2x1
jax: 0.10.0
libtpu: 0.0.40
codegen_flags: <defaults>
</compile_context>

<pallas_src>
import jax
import jax.numpy as jnp
from jax.experimental import pallas as pl
from jax.experimental.pallas import tpu as pltpu

NUM_CLASSES = 5   # external constant in the original module; fixed small value here
H1 = 128          # hidden width, layer 1
H2 = 64           # logical hidden width, layer 2
H2P = 128         # lane-padded hidden width (zero-padded; exact same math)


def _round_up(n: int, m: int) -> int:
    return ((n + m - 1) // m) * m


def _cdiv(a: int, b: int) -> int:
    return -(-a // b)


# ----------------------------- kernel -----------------------------------------


def nn_rank_kernel(x_ref, w1_ref, b1_ref, w2_ref, b2_ref, w3_ref, b3_ref, o_ref):
    # x stays f32 in HBM; cast to bf16 once here, right before the MXU.
    xb = x_ref[...].astype(jnp.bfloat16)
    # Layer 1: Linear(D, 128) + ReLU   (bf16 operands, f32 accumulation)
    h1 = jnp.dot(xb, w1_ref[...], preferred_element_type=jnp.float32) + b1_ref[...]
    h1 = jnp.maximum(h1, 0.0).astype(jnp.bfloat16)
    # Layer 2: Linear(128, 128-padded) + ReLU  (padded columns are exactly zero)
    h2 = jnp.dot(h1, w2_ref[...], preferred_element_type=jnp.float32) + b2_ref[...]
    h2 = jnp.maximum(h2, 0.0).astype(jnp.bfloat16)
    # Layer 3: Linear(128-padded, C) + Sigmoid; output stays narrow (C lanes),
    # so the writeback is only C floats per row.
    logits = jnp.dot(h2, w3_ref[...], preferred_element_type=jnp.float32) + b3_ref[...]
    o_ref[...] = jax.nn.sigmoid(logits)


# --------------------------- param handling ------------------------------------


def init_params(key, input_size, num_classes=NUM_CLASSES):
    """Deterministic init mimicking torch.nn.Linear default (uniform(-1/sqrt(in), 1/sqrt(in))).
    Weights are stored transposed: (in_features, out_features). All f32."""
    def linear(k, fan_in, fan_out):
        kw, kb = jax.random.split(k)
        bound = 1.0 / jnp.sqrt(fan_in)
        w = jax.random.uniform(kw, (fan_in, fan_out), jnp.float32, -bound, bound)
        b = jax.random.uniform(kb, (1, fan_out), jnp.float32, -bound, bound)
        return w, b

    k1, k2, k3 = jax.random.split(key, 3)
    w1, b1 = linear(k1, input_size, H1)
    w2, b2 = linear(k2, H1, H2)
    w3, b3 = linear(k3, H2, num_classes)
    return {"w1": w1, "b1": b1, "w2": w2, "b2": b2, "w3": w3, "b3": b3}


def prepare_params(params):
    """ONE-TIME prep (hoisted out of the per-call path): cast weights to bf16 and
    zero-pad the 64-wide hidden layer to 128 lanes. Biases stay f32 (added to the
    f32 accumulator)."""
    w1 = params["w1"].astype(jnp.bfloat16)                                    # (D, 128)
    b1 = params["b1"].astype(jnp.float32)                                     # (1, 128)
    w2 = jnp.pad(params["w2"], ((0, 0), (0, H2P - H2))).astype(jnp.bfloat16)  # (128, 128)
    b2 = jnp.pad(params["b2"], ((0, 0), (0, H2P - H2))).astype(jnp.float32)   # (1, 128)
    w3 = jnp.pad(params["w3"], ((0, H2P - H2), (0, 0))).astype(jnp.bfloat16)  # (128, C)
    b3 = params["b3"].astype(jnp.float32)                                     # (1, C)
    return {"w1": w1, "b1": b1, "w2": w2, "b2": b2, "w3": w3, "b3": b3}


# --------------------------- tile selection ------------------------------------


def _num_tensorcores_per_chip() -> int:
    # v7x has 2 TensorCores per chip; v5e/v6e have 1. Best-effort query.
    try:
        kind = jax.devices()[0].device_kind.lower()
        return 2 if "v7" in kind else 1
    except Exception:  # pragma: no cover - conservative fallback
        return 1


def _pick_tile_m(B: int, D: int, C: int) -> int:
    # Per-row VMEM estimate (bytes): double-buffered f32 x rows, double-buffered
    # f32 out rows, plus f32+bf16 intermediates (h1, h2, logits).
    per_row = 2 * 4 * D + 2 * 4 * C + (4 + 2) * (H1 + H2P) + 4 * C
    budget = 12 << 20  # conservative: inside v5e's 16 MiB default scoped VMEM
    vmem_cap = max(16, (budget // per_row) // 16 * 16)
    # Keep >= 2 "parallel" grid steps on 2-TC chips so both cores get work.
    per_core = _cdiv(B, _num_tensorcores_per_chip())
    tile_m = min(1024, _round_up(per_core, 16), vmem_cap)
    return max(tile_m, 16)


# ------------------------------ forward ----------------------------------------


def nn_rank_forward(x, prepared, *, tile_m=None):
    """x: (B, input_size) float32. prepared: output of prepare_params (bf16 weights)."""
    B, D = x.shape
    w1, b1 = prepared["w1"], prepared["b1"]
    w2, b2 = prepared["w2"], prepared["b2"]
    w3, b3 = prepared["w3"], prepared["b3"]
    C = w3.shape[1]

    if tile_m is None:
        tile_m = _pick_tile_m(B, D, C)

    # Ragged batch handled by Pallas edge-block masking: no jnp.pad copy of x.
    grid = (_cdiv(B, tile_m),)

    # Advisory cost estimate so XLA schedules this tiny latency-bound call sensibly.
    flops = 2 * B * (D * H1 + H1 * H2P + H2P * C)
    bytes_accessed = (
        x.size * 4
        + w1.size * 2 + w2.size * 2 + w3.size * 2
        + b1.size * 4 + b2.size * 4 + b3.size * 4
        + B * C * 4
    )
    cost = pl.CostEstimate(flops=flops, transcendentals=B * C,
                           bytes_accessed=bytes_accessed)

    # Weight blocks use a constant index_map; their (double-buffered) VMEM footprint
    # is negligible at this model size even on v7x's 64 MiB VMEM.
    return pl.pallas_call(
        nn_rank_kernel,
        out_shape=jax.ShapeDtypeStruct((B, C), jnp.float32),
        grid_spec=pl.GridSpec(
            grid=grid,
            in_specs=[
                pl.BlockSpec((tile_m, D), lambda i: (i, 0)),   # x tile (f32)
                pl.BlockSpec(w1.shape, lambda i: (0, 0)),      # w1 (full, bf16)
                pl.BlockSpec(b1.shape, lambda i: (0, 0)),      # b1 (f32)
                pl.BlockSpec(w2.shape, lambda i: (0, 0)),      # w2 (lane-padded, bf16)
                pl.BlockSpec(b2.shape, lambda i: (0, 0)),      # b2 (lane-padded, f32)
                pl.BlockSpec(w3.shape, lambda i: (0, 0)),      # w3 (row-padded, bf16)
                pl.BlockSpec(b3.shape, lambda i: (0, 0)),      # b3 (f32)
            ],
            out_specs=pl.BlockSpec((tile_m, C), lambda i: (i, 0)),  # narrow (B, C) out
        ),
        compiler_params=pltpu.CompilerParams(
            dimension_semantics=("parallel",),
        ),
        cost_estimate=cost,
    )(x, w1, b1, w2, b2, w3, b3)


# ------------------------------ reference --------------------------------------


def nn_rank_reference(x, p):
    h1 = jnp.maximum(x @ p["w1"] + p["b1"], 0.0)
    h2 = jnp.maximum(h1 @ p["w2"] + p["b2"], 0.0)
    return jax.nn.sigmoid(h2 @ p["w3"] + p["b3"])


if __name__ == "__main__":
    key = jax.random.PRNGKey(0)
    kx, kp, kx2 = jax.random.split(key, 3)

    input_size = 32
    params = init_params(kp, input_size)
    prepared = prepare_params(params)   # one-time weight cast/pad, NOT per call

    # Case 1: small batch, single tile (grid=(1,)).
    batch = 16
    x = jax.random.normal(kx, (batch, input_size), jnp.float32)
    out = jax.block_until_ready(nn_rank_forward(x, prepared))
    ref = nn_rank_reference(x, params)
    assert out.shape == (batch, NUM_CLASSES)
    # bf16 operands / f32 accumulation: small drift vs pure-f32 reference
    assert jnp.allclose(out, ref, atol=2e-2, rtol=2e-2), "mismatch vs reference (case 1)"

    # Case 2: ragged batch (not a multiple of the tile) -> masked edge block.
    batch2 = 200
    x2 = jax.random.normal(kx2, (batch2, input_size), jnp.float32)
    out2 = jax.block_until_ready(nn_rank_forward(x2, prepared, tile_m=64))
    ref2 = nn_rank_reference(x2, params)
    assert out2.shape == (batch2, NUM_CLASSES)
    assert jnp.allclose(out2, ref2, atol=2e-2, rtol=2e-2), "mismatch vs reference (case 2)"

    print("KERNEL_OK")
</pallas_src>

<mosaic_0001>
module attributes {stable_mosaic.version = 11 : i64} {
  func.func @nn_rank_kernel(%arg0: i32, %arg1: memref<16x32xf32, #tpu.memory_space<vmem>>, %arg2: memref<32x128xbf16, #tpu.memory_space<vmem>>, %arg3: memref<1x128xf32, #tpu.memory_space<vmem>>, %arg4: memref<128x128xbf16, #tpu.memory_space<vmem>>, %arg5: memref<1x128xf32, #tpu.memory_space<vmem>>, %arg6: memref<128x5xbf16, #tpu.memory_space<vmem>>, %arg7: memref<1x5xf32, #tpu.memory_space<vmem>>, %arg8: memref<16x5xf32, #tpu.memory_space<vmem>>) attributes {dimension_semantics = [#tpu.dimension_semantics<parallel>], iteration_bounds = array<i64: 1>, scalar_prefetch = 0 : i64, scratch_operands = 0 : i64, tpu.core_type = #tpu.core_type<tc>, window_params = [{transform_indices = @transform_0, window_bounds = array<i64: 16, 32>}, {pipeline_mode = #tpu.pipeline_mode<synchronous>, transform_indices = @transform_1, window_bounds = array<i64: 32, 128>}, {pipeline_mode = #tpu.pipeline_mode<synchronous>, transform_indices = @transform_2, window_bounds = array<i64: 1, 128>}, {pipeline_mode = #tpu.pipeline_mode<synchronous>, transform_indices = @transform_3, window_bounds = array<i64: 128, 128>}, {pipeline_mode = #tpu.pipeline_mode<synchronous>, transform_indices = @transform_4, window_bounds = array<i64: 1, 128>}, {pipeline_mode = #tpu.pipeline_mode<synchronous>, transform_indices = @transform_5, window_bounds = array<i64: 128, 5>}, {pipeline_mode = #tpu.pipeline_mode<synchronous>, transform_indices = @transform_6, window_bounds = array<i64: 1, 5>}, {transform_indices = @transform_7, window_bounds = array<i64: 16, 5>}]} {
    %c0 = arith.constant 0 : index
    %c0_0 = arith.constant 0 : index
    %0 = vector.load %arg1[%c0, %c0_0] : memref<16x32xf32, #tpu.memory_space<vmem>>, vector<16x32xf32>
    %1 = arith.truncf %0 : vector<16x32xf32> to vector<16x32xbf16>
    %c0_1 = arith.constant 0 : index
    %c0_2 = arith.constant 0 : index
    %2 = vector.load %arg2[%c0_1, %c0_2] : memref<32x128xbf16, #tpu.memory_space<vmem>>, vector<32x128xbf16>
    %cst = arith.constant dense<0.000000e+00> : vector<16x128xf32>
    %3 = tpu.matmul %1, %2, %cst {dimension_numbers = #tpu.dot_dimension_numbers<[1], [0], [0], [1], [0, 0, 1, 1], [], []>} : vector<16x32xbf16>, vector<32x128xbf16>, vector<16x128xf32> -> vector<16x128xf32>
    %c0_3 = arith.constant 0 : index
    %c0_4 = arith.constant 0 : index
    %4 = vector.load %arg3[%c0_3, %c0_4] : memref<1x128xf32, #tpu.memory_space<vmem>>, vector<1x128xf32>
    %5 = vector.broadcast %4 : vector<1x128xf32> to vector<16x128xf32>
    %6 = arith.addf %3, %5 : vector<16x128xf32>
    %cst_5 = arith.constant 0.000000e+00 : f32
    %7 = vector.broadcast %cst_5 : f32 to vector<16x128xf32>
    %8 = arith.maximumf %6, %7 : vector<16x128xf32>
    %9 = arith.truncf %8 : vector<16x128xf32> to vector<16x128xbf16>
    %c0_6 = arith.constant 0 : index
    %c0_7 = arith.constant 0 : index
    %10 = vector.load %arg4[%c0_6, %c0_7] : memref<128x128xbf16, #tpu.memory_space<vmem>>, vector<128x128xbf16>
    %cst_8 = arith.constant dense<0.000000e+00> : vector<16x128xf32>
    %11 = tpu.matmul %9, %10, %cst_8 {dimension_numbers = #tpu.dot_dimension_numbers<[1], [0], [0], [1], [0, 0, 1, 1], [], []>} : vector<16x128xbf16>, vector<128x128xbf16>, vector<16x128xf32> -> vector<16x128xf32>
    %c0_9 = arith.constant 0 : index
    %c0_10 = arith.constant 0 : index
    %12 = vector.load %arg5[%c0_9, %c0_10] : memref<1x128xf32, #tpu.memory_space<vmem>>, vector<1x128xf32>
    %13 = vector.broadcast %12 : vector<1x128xf32> to vector<16x128xf32>
    %14 = arith.addf %11, %13 : vector<16x128xf32>
    %cst_11 = arith.constant 0.000000e+00 : f32
    %15 = vector.broadcast %cst_11 : f32 to vector<16x128xf32>
    %16 = arith.maximumf %14, %15 : vector<16x128xf32>
    %17 = arith.truncf %16 : vector<16x128xf32> to vector<16x128xbf16>
    %c0_12 = arith.constant 0 : index
    %c0_13 = arith.constant 0 : index
    %18 = vector.load %arg6[%c0_12, %c0_13] : memref<128x5xbf16, #tpu.memory_space<vmem>>, vector<128x5xbf16>
    %cst_14 = arith.constant dense<0.000000e+00> : vector<16x5xf32>
    %19 = tpu.matmul %17, %18, %cst_14 {dimension_numbers = #tpu.dot_dimension_numbers<[1], [0], [0], [1], [0, 0, 1, 1], [], []>} : vector<16x128xbf16>, vector<128x5xbf16>, vector<16x5xf32> -> vector<16x5xf32>
    %c0_15 = arith.constant 0 : index
    %c0_16 = arith.constant 0 : index
    %20 = vector.load %arg7[%c0_15, %c0_16] : memref<1x5xf32, #tpu.memory_space<vmem>>, vector<1x5xf32>
    %21 = vector.broadcast %20 : vector<1x5xf32> to vector<16x5xf32>
    %22 = arith.addf %19, %21 : vector<16x5xf32>
    %23 = arith.negf %22 : vector<16x5xf32>
    %24 = math.exp %23 : vector<16x5xf32>
    %cst_17 = arith.constant 1.000000e+00 : f32
    %25 = vector.broadcast %cst_17 : f32 to vector<16x5xf32>
    %26 = arith.addf %25, %24 : vector<16x5xf32>
    %27 = arith.divf %25, %26 : vector<16x5xf32>
    %c0_18 = arith.constant 0 : index
    %c0_19 = arith.constant 0 : index
    %28 = vector.load %arg8[%c0_18, %c0_19] : memref<16x5xf32, #tpu.memory_space<vmem>>, vector<16x5xf32>
    tpu.vector_store %arg8[%c0_18, %c0_19], %27 {strides = array<i32>} : memref<16x5xf32, #tpu.memory_space<vmem>>, vector<16x5xf32>,
    return
  }
  func.func @transform_0(%arg0: i32) -> (i32, i32) {
    %c0_i32 = arith.constant 0 : i32
    %c0_i32_0 = arith.constant 0 : i32
    return %arg0, %c0_i32 : i32, i32
  }
  func.func @transform_1(%arg0: i32) -> (i32, i32) {
    %c0_i32 = arith.constant 0 : i32
    %c0_i32_0 = arith.constant 0 : i32
    %c0_i32_1 = arith.constant 0 : i32
    return %c0_i32, %c0_i32_0 : i32, i32
  }
  func.func @transform_2(%arg0: i32) -> (i32, i32) {
    %c0_i32 = arith.constant 0 : i32
    %c0_i32_0 = arith.constant 0 : i32
    %c0_i32_1 = arith.constant 0 : i32
    return %c0_i32, %c0_i32_0 : i32, i32
  }
  func.func @transform_3(%arg0: i32) -> (i32, i32) {
    %c0_i32 = arith.constant 0 : i32
    %c0_i32_0 = arith.constant 0 : i32
    %c0_i32_1 = arith.constant 0 : i32
    return %c0_i32, %c0_i32_0 : i32, i32
  }
  func.func @transform_4(%arg0: i32) -> (i32, i32) {
    %c0_i32 = arith.constant 0 : i32
    %c0_i32_0 = arith.constant 0 : i32
    %c0_i32_1 = arith.constant 0 : i32
    return %c0_i32, %c0_i32_0 : i32, i32
  }
  func.func @transform_5(%arg0: i32) -> (i32, i32) {
    %c0_i32 = arith.constant 0 : i32
    %c0_i32_0 = arith.constant 0 : i32
    %c0_i32_1 = arith.constant 0 : i32
    return %c0_i32, %c0_i32_0 : i32, i32
  }
  func.func @transform_6(%arg0: i32) -> (i32, i32) {
    %c0_i32 = arith.constant 0 : i32
    %c0_i32_0 = arith.constant 0 : i32
    %c0_i32_1 = arith.constant 0 : i32
    return %c0_i32, %c0_i32_0 : i32, i32
  }
  func.func @transform_7(%arg0: i32) -> (i32, i32) {
    %c0_i32 = arith.constant 0 : i32
    %c0_i32_0 = arith.constant 0 : i32
    return %arg0, %c0_i32 : i32, i32
  }
}

</mosaic_0001>

<llo_original>
// kernel: tpu_custom_call.1
$region0: #{tpu_custom_call.1}
  #allocation0 [shape = 'u32[]', space=smem, size = 0x4, offset = 0x4, fixed_abs, tag = 'smem constant byte address 0x4 - core index']
  #allocation1 [shape = 'u32[144,128]{1,0:T(1,128)}', space=vmem, size = 0x12000, scoped, tag = 'internal scratch']
  %s0 = inlined_call_operand.hbm [shape: f32[16,32], index: 0, kind: input, shape index: {}]
  %s1 = inlined_call_operand.hbm [shape: bf16[32,128], index: 1, kind: input, shape index: {}]
  %s2 = inlined_call_operand.vmem [shape: f32[1,128], index: 2, kind: input, shape index: {}]
  %s3 = inlined_call_operand.vmem [shape: bf16[128,128], index: 3, kind: input, shape index: {}]
  %s4 = inlined_call_operand.vmem [shape: f32[1,128], index: 4, kind: input, shape index: {}]
  %s5 = inlined_call_operand.vmem [shape: bf16[128,5], index: 5, kind: input, shape index: {}]
  %s6 = inlined_call_operand.vmem [shape: f32[1,5], index: 6, kind: input, shape index: {}]
  %s7 = inlined_call_operand.vmem [shape: f32[16,5], index: 7, kind: output, shape index: {}]
  %s8 = sld [smem:[#allocation0]]
  $region46: #{tpu_custom_call.1} parent=0
    _
  %s10 = ssub.s32 1, %s8
  %s11 = scalar_select 0, %s10, %s8
  $region1: #{tpu_custom_call.1} parent=0
    #allocation2 [shape = 'u8[8192]{0}', space=vmem, size = 0x2000, scoped, tag = 'input window, operand 0, single buffered']
    #allocation3 [shape = 's32[1]{0}', space=sflag, size = 0x4, scoped, tag = 'scoped memory for tpu_custom_call.1']
    #allocation4 [shape = 'u8[8192]{0}', space=vmem, size = 0x2000, scoped, tag = 'input window, operand 1, single buffered']
    #allocation5 [shape = 's32[1]{0}', space=sflag, size = 0x4, scoped, tag = 'scoped memory for tpu_custom_call.1']
    %12 = vsyncpa [#allocation3], 0
    %13 = vsyncpa [#allocation5], 0
    // Predicated region
    $region2: #{tpu_custom_call.1} parent=1 // pred_check
      _
    $region3: #{tpu_custom_call.1} parent=1 // pred_check_branch
      %15 = sbr.rel (0) target = $region5
    $region4: #{tpu_custom_call.1} parent=1 // pred_region
      %s17 = ssub.s32 256, 256
      %18 = vsyncadd [#allocation3], %s17
      %s19 = sshll.u32 [#allocation2], 4
      %s20 = int_to_ptr.vmem [resolvable:$true] %s19
      %25 = dma.hbm_to_vmem [thread:$0]  %s0, 256, %s20, [#allocation3], 128, 128, 8
    $region5: #{tpu_custom_call.1} parent=1 // pred_fallthru
      _
    // Predicated region
    $region6: #{tpu_custom_call.1} parent=1 // pred_check
      _
    $region7: #{tpu_custom_call.1} parent=1 // pred_check_branch
      %27 = sbr.rel (0) target = $region9
    $region8: #{tpu_custom_call.1} parent=1 // pred_region
      %s29 = ssub.s32 256, 256
      %30 = vsyncadd [#allocation5], %s29
      %s31 = sshll.u32 [#allocation4], 4
      %s32 = int_to_ptr.vmem [resolvable:$true] %s31
      %37 = dma.hbm_to_vmem [thread:$0]  %s1, 256, %s32, [#allocation5], 64, 64, 4
    $region9: #{tpu_custom_call.1} parent=1 // pred_fallthru
      _
    // Predicated region
    $region10: #{tpu_custom_call.1} parent=1 // pred_check
      _
    $region11: #{tpu_custom_call.1} parent=1 // pred_check_branch
      %39 = sbr.rel (0) target = $region13
    $region12: #{tpu_custom_call.1} parent=1 // pred_region
      _
    $region13: #{tpu_custom_call.1} parent=1 // pred_fallthru
      _
    // Predicated region
    $region14: #{tpu_custom_call.1} parent=1 // pred_check
      _
    $region15: #{tpu_custom_call.1} parent=1 // pred_check_branch
      %41 = sbr.rel (0) target = $region17
    $region16: #{tpu_custom_call.1} parent=1 // pred_region
      _
    $region17: #{tpu_custom_call.1} parent=1 // pred_fallthru
      _
    // Predicated region
    $region18: #{tpu_custom_call.1} parent=1 // pred_check
      _
    $region19: #{tpu_custom_call.1} parent=1 // pred_check_branch
      %43 = sbr.rel (0) target = $region21
    $region20: #{tpu_custom_call.1} parent=1 // pred_region
      _
    $region21: #{tpu_custom_call.1} parent=1 // pred_fallthru
      _
    // Predicated region
    $region22: #{tpu_custom_call.1} parent=1 // pred_check
      _
    $region23: #{tpu_custom_call.1} parent=1 // pred_check_branch
      %45 = sbr.rel (0) target = $region25
    $region24: #{tpu_custom_call.1} parent=1 // pred_region
      _
    $region25: #{tpu_custom_call.1} parent=1 // pred_fallthru
      _
    // Predicated region
    $region26: #{tpu_custom_call.1} parent=1 // pred_check
      _
    $region27: #{tpu_custom_call.1} parent=1 // pred_check_branch
      %47 = sbr.rel (0) target = $region29
    $region28: #{tpu_custom_call.1} parent=1 // pred_region
      _
    $region29: #{tpu_custom_call.1} parent=1 // pred_fallthru
      _
    // Predicated region
    $region30: #{tpu_custom_call.1} parent=1 // pred_check
      _
    $region31: #{tpu_custom_call.1} parent=1 // pred_check_branch
      %49 = sbr.rel (0) target = $region33
    $region32: #{tpu_custom_call.1} parent=1 // pred_region
      %50 = dma.done [#allocation3], 256
    $region33: #{tpu_custom_call.1} parent=1 // pred_fallthru
      _
    // Predicated region
    $region34: #{tpu_custom_call.1} parent=1 // pred_check
      _
    $region35: #{tpu_custom_call.1} parent=1 // pred_check_branch
      %52 = sbr.rel (0) target = $region37
    $region36: #{tpu_custom_call.1} parent=1 // pred_region
      %53 = dma.done [#allocation5], 256
    $region37: #{tpu_custom_call.1} parent=1 // pred_fallthru
      _
    %v55 = vld [vmem:[#allocation2] sm:$0xff]
    %v56 = vld [vmem:[#allocation2 + $0x8] sm:$0xff]
    %v57 = vpack.c.bf16 %v56, %v55
    %v58 = vld [vmem:[#allocation4] sm:$0xf]
    %v59 = vld [vmem:[#allocation4 + $0x4] sm:$0xf]
    %v60 = vld [vmem:[#allocation4 + $0x8] sm:$0xf]
    %v61 = vld [vmem:[#allocation4 + $0xc] sm:$0xf]
    %v62 = vld [vmem:[%s2] sm:$0x1]
    %v64 = vlaneseq
    %v65 = vshrl.u32 %v64, 7
    %v66 = vsub.s32 0, %v65
    %v67 = vrot.slane %v62, %v66
    %v73 = vunpack.c.l.b16 %v58
    %v74 = vunpack.c.l.b16 %v59
    %v75 = vunpack.c.l.b16 %v60
    %v76 = vunpack.c.l.b16 %v61
    %v77 = vpack.c.b16 %v74, %v73
    %v78 = vpack.c.b16 %v76, %v75
    %vm81 = vcmask 261120
    %v83 = vsel %vm81, %v57, 0
    %85 = vmatprep.subr.bf16.mxu0 0
    %86 = vmatpush1.bf16.msra.mxu0 %v77
    %87 = vmatprep.subr.bf16.mxu0 0
    %88 = vmatpush1.bf16.msra.mxu0 %v78
    %89 = vmatprep.subr.bf16.mxu0 0
    %90 = vmatpush1.bf16.msra.mxu0 0
    %91 = vmatprep.subr.bf16.mxu0 0
    %92 = vmatpush1.bf16.msra.mxu0 0
    %93 = vmatprep.subr.bf16.mxu0 0
    %94 = vmatpush1.bf16.msra.mxu0 0
    %95 = vmatprep.subr.bf16.mxu0 0
    %96 = vmatpush1.bf16.msra.mxu0 0
    %97 = vmatprep.subr.bf16.mxu0 0
    %98 = vmatpush1.bf16.msra.mxu0 0
    %99 = vmatprep.subr.bf16.mxu0 0
    %100 = vmatpush1.bf16.msra.mxu0 0
    %101 = vmatprep.subr.bf16.mxu0 0
    %102 = vmatpush1.bf16.msra.mxu0 0
    %103 = vmatprep.subr.bf16.mxu0 0
    %104 = vmatpush1.bf16.msra.mxu0 0
    %105 = vmatprep.subr.bf16.mxu0 0
    %106 = vmatpush1.bf16.msra.mxu0 0
    %107 = vmatprep.subr.bf16.mxu0 0
    %108 = vmatpush1.bf16.msra.mxu0 0
    %109 = vmatprep.subr.bf16.mxu0 0
    %110 = vmatpush1.bf16.msra.mxu0 0
    %111 = vmatprep.subr.bf16.mxu0 0
    %112 = vmatpush1.bf16.msra.mxu0 0
    %113 = vmatprep.subr.bf16.mxu0 0
    %114 = vmatpush1.bf16.msra.mxu0 0
    %115 = vmatprep.subr.bf16.mxu0 0
    %116 = vmatpush1.bf16.msra.mxu0 0
    %117 = vmatprep.mubr.bf16.mxu0 0
    %118 = vmatmul.mubr.bf16.gmra.mrb[0].mxu0 %v83
    %v119 = vpop.f32.mrb[0].mxu0
    %v120 = vadd.f32 %v67, %v119
    %v121 = vpop.f32.mrb[0].mxu0
    %v122 = vpop.f32.mrb[0].mxu0
    %v123 = vadd.f32 %v67, %v122
    %v124 = vpop.f32.mrb[0].mxu0
    %125 = vdwg.mxu0
    %v126 = vmax.f32 %v120, 0.0
    %v127 = vmax.f32 %v123, 0.0
    %v128 = vpack.c.bf16 %v127, %v126
    %v129 = vld [vmem:[%s3] sm:$0xf]
    %v130 = vld [vmem:[%s3 + $0x4] sm:$0xf]
    %v131 = vld [vmem:[%s3 + $0x8] sm:$0xf]
    %v132 = vld [vmem:[%s3 + $0xc] sm:$0xf]
    %v133 = vld [vmem:[%s3 + $0x10] sm:$0xf]
    %v134 = vld [vmem:[%s3 + $0x14] sm:$0xf]
    %v135 = vld [vmem:[%s3 + $0x18] sm:$0xf]
    %v136 = vld [vmem:[%s3 + $0x1c] sm:$0xf]
    %v137 = vld [vmem:[%s3 + $0x20] sm:$0xf]
    %v138 = vld [vmem:[%s3 + $0x24] sm:$0xf]
    %v139 = vld [vmem:[%s3 + $0x28] sm:$0xf]
    %v140 = vld [vmem:[%s3 + $0x2c] sm:$0xf]
    %v141 = vld [vmem:[%s3 + $0x30] sm:$0xf]
    %v142 = vld [vmem:[%s3 + $0x34] sm:$0xf]
    %v143 = vld [vmem:[%s3 + $0x38] sm:$0xf]
    %v144 = vld [vmem:[%s3 + $0x3c] sm:$0xf]
    %v145 = vld [vmem:[%s4] sm:$0x1]
    %v147 = vlaneseq
    %v148 = vshrl.u32 %v147, 7
    %v149 = vsub.s32 0, %v148
    %v150 = vrot.slane %v145, %v149
    %v168 = vunpack.c.l.b16 %v129
    %v169 = vunpack.c.l.b16 %v130
    %v170 = vunpack.c.l.b16 %v131
    %v171 = vunpack.c.l.b16 %v132
    %v172 = vunpack.c.l.b16 %v133
    %v173 = vunpack.c.l.b16 %v134
    %v174 = vunpack.c.l.b16 %v135
    %v175 = vunpack.c.l.b16 %v136
    %v176 = vunpack.c.l.b16 %v137
    %v177 = vunpack.c.l.b16 %v138
    %v178 = vunpack.c.l.b16 %v139
    %v179 = vunpack.c.l.b16 %v140
    %v180 = vunpack.c.l.b16 %v141
    %v181 = vunpack.c.l.b16 %v142
    %v182 = vunpack.c.l.b16 %v143
    %v183 = vunpack.c.l.b16 %v144
    %v184 = vpack.c.b16 %v169, %v168
    %v185 = vpack.c.b16 %v171, %v170
    %v186 = vpack.c.b16 %v173, %v172
    %v187 = vpack.c.b16 %v175, %v174
    %v188 = vpack.c.b16 %v177, %v176
    %v189 = vpack.c.b16 %v179, %v178
    %v190 = vpack.c.b16 %v181, %v180
    %v191 = vpack.c.b16 %v183, %v182
    %200 = vmatprep.subr.bf16.mxu0 0
    %201 = vmatpush1.bf16.msra.mxu0 %v184
    %202 = vmatprep.subr.bf16.mxu0 0
    %203 = vmatpush1.bf16.msra.mxu0 %v185
    %204 = vmatprep.subr.bf16.mxu0 0
    %205 = vmatpush1.bf16.msra.mxu0 %v186
    %206 = vmatprep.subr.bf16.mxu0 0
    %207 = vmatpush1.bf16.msra.mxu0 %v187
    %208 = vmatprep.subr.bf16.mxu0 0
    %209 = vmatpush1.bf16.msra.mxu0 %v188
    %210 = vmatprep.subr.bf16.mxu0 0
    %211 = vmatpush1.bf16.msra.mxu0 %v189
    %212 = vmatprep.subr.bf16.mxu0 0
    %213 = vmatpush1.bf16.msra.mxu0 %v190
    %214 = vmatprep.subr.bf16.mxu0 0
    %215 = vmatpush1.bf16.msra.mxu0 %v191
    %216 = vmatprep.subr.bf16.mxu0 0
    %217 = vmatpush1.bf16.msra.mxu0 0
    %218 = vmatprep.subr.bf16.mxu0 0
    %219 = vmatpush1.bf16.msra.mxu0 0
    %220 = vmatprep.subr.bf16.mxu0 0
    %221 = vmatpush1.bf16.msra.mxu0 0
    %222 = vmatprep.subr.bf16.mxu0 0
    %223 = vmatpush1.bf16.msra.mxu0 0
    %224 = vmatprep.subr.bf16.mxu0 0
    %225 = vmatpush1.bf16.msra.mxu0 0
    %226 = vmatprep.subr.bf16.mxu0 0
    %227 = vmatpush1.bf16.msra.mxu0 0
    %228 = vmatprep.subr.bf16.mxu0 0
    %229 = vmatpush1.bf16.msra.mxu0 0
    %230 = vmatprep.subr.bf16.mxu0 0
    %231 = vmatpush1.bf16.msra.mxu0 0
    %232 = vmatprep.mubr.bf16.mxu0 0
    %233 = vmatmul.mubr.bf16.gmra.mrb[0].mxu0 %v128
    %v234 = vpop.f32.mrb[0].mxu0
    %v235 = vadd.f32 %v150, %v234
    %v236 = vpop.f32.mrb[0].mxu0
    %v237 = vpop.f32.mrb[0].mxu0
    %v238 = vadd.f32 %v150, %v237
    %v239 = vpop.f32.mrb[0].mxu0
    %240 = vdwg.mxu0
    %v241 = vmax.f32 %v235, 0.0
    %v242 = vmax.f32 %v238, 0.0
    %v243 = vpack.c.bf16 %v242, %v241
    %v244 = vld [vmem:[%s5] sm:$0xf]
    %v245 = vld [vmem:[%s5 + $0x4] sm:$0xf]
    %v246 = vld [vmem:[%s5 + $0x8] sm:$0xf]
    %v247 = vld [vmem:[%s5 + $0xc] sm:$0xf]
    %v248 = vld [vmem:[%s5 + $0x10] sm:$0xf]
    %v249 = vld [vmem:[%s5 + $0x14] sm:$0xf]
    %v250 = vld [vmem:[%s5 + $0x18] sm:$0xf]
    %v251 = vld [vmem:[%s5 + $0x1c] sm:$0xf]
    %v252 = vld [vmem:[%s5 + $0x20] sm:$0xf]
    %v253 = vld [vmem:[%s5 + $0x24] sm:$0xf]
    %v254 = vld [vmem:[%s5 + $0x28] sm:$0xf]
    %v255 = vld [vmem:[%s5 + $0x2c] sm:$0xf]
    %v256 = vld [vmem:[%s5 + $0x30] sm:$0xf]
    %v257 = vld [vmem:[%s5 + $0x34] sm:$0xf]
    %v258 = vld [vmem:[%s5 + $0x38] sm:$0xf]
    %v259 = vld [vmem:[%s5 + $0x3c] sm:$0xf]
    %v260 = vld [vmem:[%s6] sm:$0x1]
    %v262 = vlaneseq
    %v263 = vshrl.u32 %v262, 7
    %v264 = vsub.s32 0, %v263
    %v265 = vrot.slane %v260, %v264
    %v283 = vunpack.c.l.b16 %v244
    %v284 = vunpack.c.l.b16 %v245
    %v285 = vunpack.c.l.b16 %v246
    %v286 = vunpack.c.l.b16 %v247
    %v287 = vunpack.c.l.b16 %v248
    %v288 = vunpack.c.l.b16 %v249
    %v289 = vunpack.c.l.b16 %v250
    %v290 = vunpack.c.l.b16 %v251
    %v291 = vunpack.c.l.b16 %v252
    %v292 = vunpack.c.l.b16 %v253
    %v293 = vunpack.c.l.b16 %v254
    %v294 = vunpack.c.l.b16 %v255
    %v295 = vunpack.c.l.b16 %v256
    %v296 = vunpack.c.l.b16 %v257
    %v297 = vunpack.c.l.b16 %v258
    %v298 = vunpack.c.l.b16 %v259
    %v299 = vpack.c.b16 %v284, %v283
    %v300 = vpack.c.b16 %v286, %v285
    %v301 = vpack.c.b16 %v288, %v287
    %v302 = vpack.c.b16 %v290, %v289
    %v303 = vpack.c.b16 %v292, %v291
    %v304 = vpack.c.b16 %v294, %v293
    %v305 = vpack.c.b16 %v296, %v295
    %v306 = vpack.c.b16 %v298, %v297
    %315 = vmatprep.subr.bf16.mxu0 0
    %316 = vmatpush1.bf16.msra.mxu0 %v299
    %317 = vmatprep.subr.bf16.mxu0 0
    %318 = vmatpush1.bf16.msra.mxu0 %v300
    %319 = vmatprep.subr.bf16.mxu0 0
    %320 = vmatpush1.bf16.msra.mxu0 %v301
    %321 = vmatprep.subr.bf16.mxu0 0
    %322 = vmatpush1.bf16.msra.mxu0 %v302
    %323 = vmatprep.subr.bf16.mxu0 0
    %324 = vmatpush1.bf16.msra.mxu0 %v303
    %325 = vmatprep.subr.bf16.mxu0 0
    %326 = vmatpush1.bf16.msra.mxu0 %v304
    %327 = vmatprep.subr.bf16.mxu0 0
    %328 = vmatpush1.bf16.msra.mxu0 %v305
    %329 = vmatprep.subr.bf16.mxu0 0
    %330 = vmatpush1.bf16.msra.mxu0 %v306
    %331 = vmatprep.subr.bf16.mxu0 0
    %332 = vmatpush1.bf16.msra.mxu0 0
    %333 = vmatprep.subr.bf16.mxu0 0
    %334 = vmatpush1.bf16.msra.mxu0 0
    %335 = vmatprep.subr.bf16.mxu0 0
    %336 = vmatpush1.bf16.msra.mxu0 0
    %337 = vmatprep.subr.bf16.mxu0 0
    %338 = vmatpush1.bf16.msra.mxu0 0
    %339 = vmatprep.subr.bf16.mxu0 0
    %340 = vmatpush1.bf16.msra.mxu0 0
    %341 = vmatprep.subr.bf16.mxu0 0
    %342 = vmatpush1.bf16.msra.mxu0 0
    %343 = vmatprep.subr.bf16.mxu0 0
    %344 = vmatpush1.bf16.msra.mxu0 0
    %345 = vmatprep.subr.bf16.mxu0 0
    %346 = vmatpush1.bf16.msra.mxu0 0
    %347 = vmatprep.mubr.bf16.mxu0 0
    %348 = vmatmul.mubr.bf16.gmra.mrb[0].mxu0 %v243
    %v349 = vpop.f32.mrb[0].mxu0
    %v350 = vadd.f32 %v265, %v349
    %v351 = vpop.f32.mrb[0].mxu0
    %v352 = vpop.f32.mrb[0].mxu0
    %v353 = vadd.f32 %v265, %v352
    %v354 = vpop.f32.mrb[0].mxu0
    %355 = vdwg.mxu0
    %v356 = vxor.u32 %v350, 2147483648
    %v357 = vxor.u32 %v353, 2147483648
    %v358 = vmul.f32 %v356, 1.442695
    %v359 = vpow.pop %v358
    %v360 = vmul.f32 %v357, 1.442695
    %v361 = vpow.pop %v360
    %v362 = vadd.f32 %v359, 1.0
    %v363 = vadd.f32 %v361, 1.0
    %v364 = vrcp.pop %v362
    %v365 = vmul.f32 1.0, %v364
    %v366 = vrcp.pop %v363
    %v367 = vmul.f32 1.0, %v366
    %vm368 = vcmask 39936
    %369 = vst.msk [vmem:[%s7] sm:$0xff] %vm368, %v365
    %370 = vst.msk [vmem:[%s7 + $0x8] sm:$0xff] %vm368, %v367
    // Predicated region
    $region38: #{tpu_custom_call.1} parent=1 // pred_check
      _
    $region39: #{tpu_custom_call.1} parent=1 // pred_check_branch
      %372 = sbr.rel (0) target = $region41
    $region40: #{tpu_custom_call.1} parent=1 // pred_region
      _
    $region41: #{tpu_custom_call.1} parent=1 // pred_fallthru
      _
    // Predicated region
    $region42: #{tpu_custom_call.1} parent=1 // pred_check
      _
    $region43: #{tpu_custom_call.1} parent=1 // pred_check_branch
      %374 = sbr.rel (0) target = $region45
    $region44: #{tpu_custom_call.1} parent=1 // pred_region
      _
    $region45: #{tpu_custom_call.1} parent=1 // pred_fallthru
      _
    %375 = vsyncpa [#allocation3], 1
    %376 = vsyncpa [#allocation5], 1

</llo_original>
